<compile_context>
chip_gen: v5e
topology: v5e:2x2
jax: 0.10.0
libtpu: 0.0.40
codegen_flags: <defaults>
</compile_context>

<pallas_src>
import math

import jax
import jax.numpy as jnp
from jax import lax
from jax.experimental import pallas as pl
from jax.experimental.pallas import tpu as pltpu


def _self_attn_kernel(x_ref, wqkv_ref, wu_ref, bias_ref, o_ref):
    """One grid step = one batch element. All heads handled inside."""
    T, E = x_ref.shape[1], x_ref.shape[2]
    HE = wu_ref.shape[0]          # H * E
    H = HE // E
    scale = 1.0 / math.sqrt(E)

    x = x_ref[0]                  # (T, E)

    # Fused Q/K/V projection: (T, E) @ (E, 3*H*E) -> (T, 3*H*E)
    qkv = jnp.dot(x, wqkv_ref[...], preferred_element_type=jnp.float32)
    q_all = qkv[:, 0:HE]          # (T, H*E)
    k_all = qkv[:, HE:2 * HE]
    v_all = qkv[:, 2 * HE:3 * HE]

    # Per-head scaled dot-product attention (static unroll; 2-D MXU ops only).
    # dot_general contracts dim E of q with dim E of k -> (T, T) scores,
    # avoiding an explicit k transpose.
    dn_qk = (((1,), (1,)), ((), ()))
    head_outs = []
    for h in range(H):
        lo = h * E
        qh = q_all[:, lo:lo + E]       # (T, E)
        kh = k_all[:, lo:lo + E]
        vh = v_all[:, lo:lo + E]

        s = lax.dot_general(qh, kh, dn_qk,
                            preferred_element_type=jnp.float32) * scale
        s = s - jnp.max(s, axis=-1, keepdims=True)     # numerical stability
        p = jnp.exp(s)
        p = p * pl.reciprocal(jnp.sum(p, axis=-1, keepdims=True), approx=True)

        head_outs.append(
            jnp.dot(p, vh, preferred_element_type=jnp.float32))  # (T, E)

    # Concatenate heads -> (T, H*E) and unify with a single K = H*E matmul.
    cat = jnp.concatenate(head_outs, axis=-1)                     # (T, H*E)
    out = jnp.dot(cat, wu_ref[...], preferred_element_type=jnp.float32)
    out = out + bias_ref[...]                                     # (1, E) bias
    o_ref[0] = out.astype(o_ref.dtype)


def self_attention(x, wq, wk, wv, wu, bias):
    """x: (B, T, E) float32
       wq/wk/wv: (E, H*E) float32   (PyTorch Linear weight transposed: y = x @ W.T)
       wu: (H*E, E) float32         (unifyheads weight transposed)
       bias: (1, E) float32         (unifyheads bias)
    """
    B, T, E = x.shape
    HE = wu.shape[0]

    # One fused QKV weight: (E, 3*H*E). Built once in the wrapper (XLA concat);
    # inside the kernel it feeds a single lane-dense projection matmul.
    wqkv = jnp.concatenate([wq, wk, wv], axis=1)

    grid_spec = pltpu.PrefetchScalarGridSpec(
        num_scalar_prefetch=0,
        grid=(B,),
        in_specs=[
            pl.BlockSpec((1, T, E), lambda b: (b, 0, 0)),     # x
            pl.BlockSpec((E, 3 * HE), lambda b: (0, 0)),      # W_qkv (fused)
            pl.BlockSpec((HE, E), lambda b: (0, 0)),          # W_unify
            pl.BlockSpec((1, E), lambda b: (0, 0)),           # bias
        ],
        out_specs=pl.BlockSpec((1, T, E), lambda b: (b, 0, 0)),
    )

    return pl.pallas_call(
        _self_attn_kernel,
        out_shape=jax.ShapeDtypeStruct((B, T, E), jnp.float32),
        grid_spec=grid_spec,
        compiler_params=pltpu.CompilerParams(
            dimension_semantics=("parallel",)),
    )(x, wqkv, wu, bias)


def self_attention_ref(x, wq, wk, wv, wu, bias):
    """Pure-JAX reference matching the PyTorch forward semantics (mask=False)."""
    B, T, E = x.shape
    H = wu.shape[0] // E
    q = (x @ wq).reshape(B, T, H, E).transpose(0, 2, 1, 3)   # (B, H, T, E)
    k = (x @ wk).reshape(B, T, H, E).transpose(0, 2, 1, 3)
    v = (x @ wv).reshape(B, T, H, E).transpose(0, 2, 1, 3)
    s = jnp.einsum('bhte,bhse->bhts', q, k) / math.sqrt(E)
    p = jax.nn.softmax(s, axis=-1)
    o = jnp.einsum('bhts,bhse->bhte', p, v)
    o = o.transpose(0, 2, 1, 3).reshape(B, T, H * E)
    return o @ wu + bias


if __name__ == "__main__":
    # Small shapes consistent with the module: batch=2, seq=8, embeddings=32, heads=8
    B, T, E, H = 2, 8, 32, 8

    key = jax.random.PRNGKey(0)
    kx, kq, kk, kv, ku, kb = jax.random.split(key, 6)

    x = jax.random.normal(kx, (B, T, E), dtype=jnp.float32)

    # PyTorch Linear(e, e*h) has weight (e*h, e); y = x @ W.T, then view(.., h, e).
    # We pass W.T directly: shape (E, H*E); head h lives in columns [h*E:(h+1)*E].
    scale_in = 1.0 / math.sqrt(E)
    wq = jax.random.uniform(kq, (E, H * E), jnp.float32, -scale_in, scale_in)
    wk = jax.random.uniform(kk, (E, H * E), jnp.float32, -scale_in, scale_in)
    wv = jax.random.uniform(kv, (E, H * E), jnp.float32, -scale_in, scale_in)

    # unifyheads: Linear(h*e, e) -> weight (e, h*e); y = cat_heads @ W.T + b.
    scale_u = 1.0 / math.sqrt(H * E)
    wu = jax.random.uniform(ku, (H * E, E), jnp.float32, -scale_u, scale_u)
    bias = jax.random.uniform(kb, (1, E), jnp.float32, -scale_u, scale_u)

    out = self_attention(x, wq, wk, wv, wu, bias)
    out = jax.block_until_ready(out)

    ref = self_attention_ref(x, wq, wk, wv, wu, bias)
    assert out.shape == (B, T, E)
    # approx reciprocal (EUP) in the softmax denominator -> slightly looser
    # tolerance; margin covers per-generation EUP precision differences.
    assert jnp.allclose(out, ref, atol=2e-3, rtol=2e-3), "mismatch vs reference"

    print("KERNEL_OK")
</pallas_src>

<mosaic_0001>
module attributes {stable_mosaic.version = 11 : i64} {
  func.func @_self_attn_kernel(%arg0: i32, %arg1: memref<1x8x32xf32, #tpu.memory_space<vmem>>, %arg2: memref<32x768xf32, #tpu.memory_space<vmem>>, %arg3: memref<256x32xf32, #tpu.memory_space<vmem>>, %arg4: memref<1x32xf32, #tpu.memory_space<vmem>>, %arg5: memref<1x8x32xf32, #tpu.memory_space<vmem>>) attributes {dimension_semantics = [#tpu.dimension_semantics<parallel>], iteration_bounds = array<i64: 2>, scalar_prefetch = 0 : i64, scratch_operands = 0 : i64, tpu.core_type = #tpu.core_type<tc>, window_params = [{transform_indices = @transform_0, window_bounds = array<i64: 1, 8, 32>}, {pipeline_mode = #tpu.pipeline_mode<synchronous>, transform_indices = @transform_1, window_bounds = array<i64: 32, 768>}, {pipeline_mode = #tpu.pipeline_mode<synchronous>, transform_indices = @transform_2, window_bounds = array<i64: 256, 32>}, {pipeline_mode = #tpu.pipeline_mode<synchronous>, transform_indices = @transform_3, window_bounds = array<i64: 1, 32>}, {transform_indices = @transform_4, window_bounds = array<i64: 1, 8, 32>}]} {
    %c0 = arith.constant 0 : index
    %c0_0 = arith.constant 0 : index
    %c0_1 = arith.constant 0 : index
    %0 = vector.load %arg1[%c0, %c0_0, %c0_1] : memref<1x8x32xf32, #tpu.memory_space<vmem>>, vector<1x8x32xf32>
    %1 = vector.shape_cast %0 : vector<1x8x32xf32> to vector<8x32xf32>
    %c0_2 = arith.constant 0 : index
    %c0_3 = arith.constant 0 : index
    %2 = vector.load %arg2[%c0_2, %c0_3] : memref<32x768xf32, #tpu.memory_space<vmem>>, vector<32x768xf32>
    %cst = arith.constant dense<0.000000e+00> : vector<8x768xf32>
    %3 = tpu.matmul %1, %2, %cst {dimension_numbers = #tpu.dot_dimension_numbers<[1], [0], [0], [1], [0, 0, 1, 1], [], []>} : vector<8x32xf32>, vector<32x768xf32>, vector<8x768xf32> -> vector<8x768xf32>
    %4 = vector.extract_strided_slice %3 {offsets = [0, 0], sizes = [8, 256], strides = [1, 1]} : vector<8x768xf32> to vector<8x256xf32>
    %5 = vector.extract_strided_slice %3 {offsets = [0, 256], sizes = [8, 256], strides = [1, 1]} : vector<8x768xf32> to vector<8x256xf32>
    %6 = vector.extract_strided_slice %3 {offsets = [0, 512], sizes = [8, 256], strides = [1, 1]} : vector<8x768xf32> to vector<8x256xf32>
    %7 = vector.extract_strided_slice %4 {offsets = [0, 0], sizes = [8, 32], strides = [1, 1]} : vector<8x256xf32> to vector<8x32xf32>
    %8 = vector.extract_strided_slice %5 {offsets = [0, 0], sizes = [8, 32], strides = [1, 1]} : vector<8x256xf32> to vector<8x32xf32>
    %9 = vector.extract_strided_slice %6 {offsets = [0, 0], sizes = [8, 32], strides = [1, 1]} : vector<8x256xf32> to vector<8x32xf32>
    %cst_4 = arith.constant dense<0.000000e+00> : vector<8x8xf32>
    %10 = tpu.matmul %7, %8, %cst_4 {dimension_numbers = #tpu.dot_dimension_numbers<[1], [1], [0], [0], [0, 0, 1, 0], [], []>} : vector<8x32xf32>, vector<8x32xf32>, vector<8x8xf32> -> vector<8x8xf32>
    %cst_5 = arith.constant 0.176776692 : f32
    %11 = vector.broadcast %cst_5 : f32 to vector<8x8xf32>
    %12 = arith.mulf %10, %11 : vector<8x8xf32>
    %cst_6 = arith.constant dense<0xFF800000> : vector<8xf32>
    %13 = vector.multi_reduction <maximumf>, %12, %cst_6 [1] : vector<8x8xf32> to vector<8xf32>
    %14 = vector.shape_cast %13 : vector<8xf32> to vector<8x1xf32>
    %15 = vector.broadcast %14 : vector<8x1xf32> to vector<8x8xf32>
    %16 = arith.subf %12, %15 : vector<8x8xf32>
    %17 = math.exp %16 : vector<8x8xf32>
    %cst_7 = arith.constant dense<0.000000e+00> : vector<8xf32>
    %18 = vector.multi_reduction <add>, %17, %cst_7 [1] : vector<8x8xf32> to vector<8xf32>
    %19 = vector.shape_cast %18 : vector<8xf32> to vector<8x1xf32>
    %20 = tpu.reciprocal %19 {approx = true} : vector<8x1xf32> -> vector<8x1xf32>
    %21 = vector.broadcast %20 : vector<8x1xf32> to vector<8x8xf32>
    %22 = arith.mulf %17, %21 : vector<8x8xf32>
    %cst_8 = arith.constant dense<0.000000e+00> : vector<8x32xf32>
    %23 = tpu.matmul %22, %9, %cst_8 {dimension_numbers = #tpu.dot_dimension_numbers<[1], [0], [0], [1], [0, 0, 1, 1], [], []>} : vector<8x8xf32>, vector<8x32xf32>, vector<8x32xf32> -> vector<8x32xf32>
    %24 = vector.extract_strided_slice %4 {offsets = [0, 32], sizes = [8, 32], strides = [1, 1]} : vector<8x256xf32> to vector<8x32xf32>
    %25 = vector.extract_strided_slice %5 {offsets = [0, 32], sizes = [8, 32], strides = [1, 1]} : vector<8x256xf32> to vector<8x32xf32>
    %26 = vector.extract_strided_slice %6 {offsets = [0, 32], sizes = [8, 32], strides = [1, 1]} : vector<8x256xf32> to vector<8x32xf32>
    %cst_9 = arith.constant dense<0.000000e+00> : vector<8x8xf32>
    %27 = tpu.matmul %24, %25, %cst_9 {dimension_numbers = #tpu.dot_dimension_numbers<[1], [1], [0], [0], [0, 0, 1, 0], [], []>} : vector<8x32xf32>, vector<8x32xf32>, vector<8x8xf32> -> vector<8x8xf32>
    %cst_10 = arith.constant 0.176776692 : f32
    %28 = vector.broadcast %cst_10 : f32 to vector<8x8xf32>
    %29 = arith.mulf %27, %28 : vector<8x8xf32>
    %cst_11 = arith.constant dense<0xFF800000> : vector<8xf32>
    %30 = vector.multi_reduction <maximumf>, %29, %cst_11 [1] : vector<8x8xf32> to vector<8xf32>
    %31 = vector.shape_cast %30 : vector<8xf32> to vector<8x1xf32>
    %32 = vector.broadcast %31 : vector<8x1xf32> to vector<8x8xf32>
    %33 = arith.subf %29, %32 : vector<8x8xf32>
    %34 = math.exp %33 : vector<8x8xf32>
    %cst_12 = arith.constant dense<0.000000e+00> : vector<8xf32>
    %35 = vector.multi_reduction <add>, %34, %cst_12 [1] : vector<8x8xf32> to vector<8xf32>
    %36 = vector.shape_cast %35 : vector<8xf32> to vector<8x1xf32>
    %37 = tpu.reciprocal %36 {approx = true} : vector<8x1xf32> -> vector<8x1xf32>
    %38 = vector.broadcast %37 : vector<8x1xf32> to vector<8x8xf32>
    %39 = arith.mulf %34, %38 : vector<8x8xf32>
    %cst_13 = arith.constant dense<0.000000e+00> : vector<8x32xf32>
    %40 = tpu.matmul %39, %26, %cst_13 {dimension_numbers = #tpu.dot_dimension_numbers<[1], [0], [0], [1], [0, 0, 1, 1], [], []>} : vector<8x8xf32>, vector<8x32xf32>, vector<8x32xf32> -> vector<8x32xf32>
    %41 = vector.extract_strided_slice %4 {offsets = [0, 64], sizes = [8, 32], strides = [1, 1]} : vector<8x256xf32> to vector<8x32xf32>
    %42 = vector.extract_strided_slice %5 {offsets = [0, 64], sizes = [8, 32], strides = [1, 1]} : vector<8x256xf32> to vector<8x32xf32>
    %43 = vector.extract_strided_slice %6 {offsets = [0, 64], sizes = [8, 32], strides = [1, 1]} : vector<8x256xf32> to vector<8x32xf32>
    %cst_14 = arith.constant dense<0.000000e+00> : vector<8x8xf32>
    %44 = tpu.matmul %41, %42, %cst_14 {dimension_numbers = #tpu.dot_dimension_numbers<[1], [1], [0], [0], [0, 0, 1, 0], [], []>} : vector<8x32xf32>, vector<8x32xf32>, vector<8x8xf32> -> vector<8x8xf32>
    %cst_15 = arith.constant 0.176776692 : f32
    %45 = vector.broadcast %cst_15 : f32 to vector<8x8xf32>
    %46 = arith.mulf %44, %45 : vector<8x8xf32>
    %cst_16 = arith.constant dense<0xFF800000> : vector<8xf32>
    %47 = vector.multi_reduction <maximumf>, %46, %cst_16 [1] : vector<8x8xf32> to vector<8xf32>
    %48 = vector.shape_cast %47 : vector<8xf32> to vector<8x1xf32>
    %49 = vector.broadcast %48 : vector<8x1xf32> to vector<8x8xf32>
    %50 = arith.subf %46, %49 : vector<8x8xf32>
    %51 = math.exp %50 : vector<8x8xf32>
    %cst_17 = arith.constant dense<0.000000e+00> : vector<8xf32>
    %52 = vector.multi_reduction <add>, %51, %cst_17 [1] : vector<8x8xf32> to vector<8xf32>
    %53 = vector.shape_cast %52 : vector<8xf32> to vector<8x1xf32>
    %54 = tpu.reciprocal %53 {approx = true} : vector<8x1xf32> -> vector<8x1xf32>
    %55 = vector.broadcast %54 : vector<8x1xf32> to vector<8x8xf32>
    %56 = arith.mulf %51, %55 : vector<8x8xf32>
    %cst_18 = arith.constant dense<0.000000e+00> : vector<8x32xf32>
    %57 = tpu.matmul %56, %43, %cst_18 {dimension_numbers = #tpu.dot_dimension_numbers<[1], [0], [0], [1], [0, 0, 1, 1], [], []>} : vector<8x8xf32>, vector<8x32xf32>, vector<8x32xf32> -> vector<8x32xf32>
    %58 = vector.extract_strided_slice %4 {offsets = [0, 96], sizes = [8, 32], strides = [1, 1]} : vector<8x256xf32> to vector<8x32xf32>
    %59 = vector.extract_strided_slice %5 {offsets = [0, 96], sizes = [8, 32], strides = [1, 1]} : vector<8x256xf32> to vector<8x32xf32>
    %60 = vector.extract_strided_slice %6 {offsets = [0, 96], sizes = [8, 32], strides = [1, 1]} : vector<8x256xf32> to vector<8x32xf32>
    %cst_19 = arith.constant dense<0.000000e+00> : vector<8x8xf32>
    %61 = tpu.matmul %58, %59, %cst_19 {dimension_numbers = #tpu.dot_dimension_numbers<[1], [1], [0], [0], [0, 0, 1, 0], [], []>} : vector<8x32xf32>, vector<8x32xf32>, vector<8x8xf32> -> vector<8x8xf32>
    %cst_20 = arith.constant 0.176776692 : f32
    %62 = vector.broadcast %cst_20 : f32 to vector<8x8xf32>
    %63 = arith.mulf %61, %62 : vector<8x8xf32>
    %cst_21 = arith.constant dense<0xFF800000> : vector<8xf32>
    %64 = vector.multi_reduction <maximumf>, %63, %cst_21 [1] : vector<8x8xf32> to vector<8xf32>
    %65 = vector.shape_cast %64 : vector<8xf32> to vector<8x1xf32>
    %66 = vector.broadcast %65 : vector<8x1xf32> to vector<8x8xf32>
    %67 = arith.subf %63, %66 : vector<8x8xf32>
    %68 = math.exp %67 : vector<8x8xf32>
    %cst_22 = arith.constant dense<0.000000e+00> : vector<8xf32>
    %69 = vector.multi_reduction <add>, %68, %cst_22 [1] : vector<8x8xf32> to vector<8xf32>
    %70 = vector.shape_cast %69 : vector<8xf32> to vector<8x1xf32>
    %71 = tpu.reciprocal %70 {approx = true} : vector<8x1xf32> -> vector<8x1xf32>
    %72 = vector.broadcast %71 : vector<8x1xf32> to vector<8x8xf32>
    %73 = arith.mulf %68, %72 : vector<8x8xf32>
    %cst_23 = arith.constant dense<0.000000e+00> : vector<8x32xf32>
    %74 = tpu.matmul %73, %60, %cst_23 {dimension_numbers = #tpu.dot_dimension_numbers<[1], [0], [0], [1], [0, 0, 1, 1], [], []>} : vector<8x8xf32>, vector<8x32xf32>, vector<8x32xf32> -> vector<8x32xf32>
    %75 = vector.extract_strided_slice %4 {offsets = [0, 128], sizes = [8, 32], strides = [1, 1]} : vector<8x256xf32> to vector<8x32xf32>
    %76 = vector.extract_strided_slice %5 {offsets = [0, 128], sizes = [8, 32], strides = [1, 1]} : vector<8x256xf32> to vector<8x32xf32>
    %77 = vector.extract_strided_slice %6 {offsets = [0, 128], sizes = [8, 32], strides = [1, 1]} : vector<8x256xf32> to vector<8x32xf32>
    %cst_24 = arith.constant dense<0.000000e+00> : vector<8x8xf32>
    %78 = tpu.matmul %75, %76, %cst_24 {dimension_numbers = #tpu.dot_dimension_numbers<[1], [1], [0], [0], [0, 0, 1, 0], [], []>} : vector<8x32xf32>, vector<8x32xf32>, vector<8x8xf32> -> vector<8x8xf32>
    %cst_25 = arith.constant 0.176776692 : f32
    %79 = vector.broadcast %cst_25 : f32 to vector<8x8xf32>
    %80 = arith.mulf %78, %79 : vector<8x8xf32>
    %cst_26 = arith.constant dense<0xFF800000> : vector<8xf32>
    %81 = vector.multi_reduction <maximumf>, %80, %cst_26 [1] : vector<8x8xf32> to vector<8xf32>
    %82 = vector.shape_cast %81 : vector<8xf32> to vector<8x1xf32>
    %83 = vector.broadcast %82 : vector<8x1xf32> to vector<8x8xf32>
    %84 = arith.subf %80, %83 : vector<8x8xf32>
    %85 = math.exp %84 : vector<8x8xf32>
    %cst_27 = arith.constant dense<0.000000e+00> : vector<8xf32>
    %86 = vector.multi_reduction <add>, %85, %cst_27 [1] : vector<8x8xf32> to vector<8xf32>
    %87 = vector.shape_cast %86 : vector<8xf32> to vector<8x1xf32>
    %88 = tpu.reciprocal %87 {approx = true} : vector<8x1xf32> -> vector<8x1xf32>
    %89 = vector.broadcast %88 : vector<8x1xf32> to vector<8x8xf32>
    %90 = arith.mulf %85, %89 : vector<8x8xf32>
    %cst_28 = arith.constant dense<0.000000e+00> : vector<8x32xf32>
    %91 = tpu.matmul %90, %77, %cst_28 {dimension_numbers = #tpu.dot_dimension_numbers<[1], [0], [0], [1], [0, 0, 1, 1], [], []>} : vector<8x8xf32>, vector<8x32xf32>, vector<8x32xf32> -> vector<8x32xf32>
    %92 = vector.extract_strided_slice %4 {offsets = [0, 160], sizes = [8, 32], strides = [1, 1]} : vector<8x256xf32> to vector<8x32xf32>
    %93 = vector.extract_strided_slice %5 {offsets = [0, 160], sizes = [8, 32], strides = [1, 1]} : vector<8x256xf32> to vector<8x32xf32>
    %94 = vector.extract_strided_slice %6 {offsets = [0, 160], sizes = [8, 32], strides = [1, 1]} : vector<8x256xf32> to vector<8x32xf32>
    %cst_29 = arith.constant dense<0.000000e+00> : vector<8x8xf32>
    %95 = tpu.matmul %92, %93, %cst_29 {dimension_numbers = #tpu.dot_dimension_numbers<[1], [1], [0], [0], [0, 0, 1, 0], [], []>} : vector<8x32xf32>, vector<8x32xf32>, vector<8x8xf32> -> vector<8x8xf32>
    %cst_30 = arith.constant 0.176776692 : f32
    %96 = vector.broadcast %cst_30 : f32 to vector<8x8xf32>
    %97 = arith.mulf %95, %96 : vector<8x8xf32>
    %cst_31 = arith.constant dense<0xFF800000> : vector<8xf32>
    %98 = vector.multi_reduction <maximumf>, %97, %cst_31 [1] : vector<8x8xf32> to vector<8xf32>
    %99 = vector.shape_cast %98 : vector<8xf32> to vector<8x1xf32>
    %100 = vector.broadcast %99 : vector<8x1xf32> to vector<8x8xf32>
    %101 = arith.subf %97, %100 : vector<8x8xf32>
    %102 = math.exp %101 : vector<8x8xf32>
    %cst_32 = arith.constant dense<0.000000e+00> : vector<8xf32>
    %103 = vector.multi_reduction <add>, %102, %cst_32 [1] : vector<8x8xf32> to vector<8xf32>
    %104 = vector.shape_cast %103 : vector<8xf32> to vector<8x1xf32>
    %105 = tpu.reciprocal %104 {approx = true} : vector<8x1xf32> -> vector<8x1xf32>
    %106 = vector.broadcast %105 : vector<8x1xf32> to vector<8x8xf32>
    %107 = arith.mulf %102, %106 : vector<8x8xf32>
    %cst_33 = arith.constant dense<0.000000e+00> : vector<8x32xf32>
    %108 = tpu.matmul %107, %94, %cst_33 {dimension_numbers = #tpu.dot_dimension_numbers<[1], [0], [0], [1], [0, 0, 1, 1], [], []>} : vector<8x8xf32>, vector<8x32xf32>, vector<8x32xf32> -> vector<8x32xf32>
    %109 = vector.extract_strided_slice %4 {offsets = [0, 192], sizes = [8, 32], strides = [1, 1]} : vector<8x256xf32> to vector<8x32xf32>
    %110 = vector.extract_strided_slice %5 {offsets = [0, 192], sizes = [8, 32], strides = [1, 1]} : vector<8x256xf32> to vector<8x32xf32>
    %111 = vector.extract_strided_slice %6 {offsets = [0, 192], sizes = [8, 32], strides = [1, 1]} : vector<8x256xf32> to vector<8x32xf32>
    %cst_34 = arith.constant dense<0.000000e+00> : vector<8x8xf32>
    %112 = tpu.matmul %109, %110, %cst_34 {dimension_numbers = #tpu.dot_dimension_numbers<[1], [1], [0], [0], [0, 0, 1, 0], [], []>} : vector<8x32xf32>, vector<8x32xf32>, vector<8x8xf32> -> vector<8x8xf32>
    %cst_35 = arith.constant 0.176776692 : f32
    %113 = vector.broadcast %cst_35 : f32 to vector<8x8xf32>
    %114 = arith.mulf %112, %113 : vector<8x8xf32>
    %cst_36 = arith.constant dense<0xFF800000> : vector<8xf32>
    %115 = vector.multi_reduction <maximumf>, %114, %cst_36 [1] : vector<8x8xf32> to vector<8xf32>
    %116 = vector.shape_cast %115 : vector<8xf32> to vector<8x1xf32>
    %117 = vector.broadcast %116 : vector<8x1xf32> to vector<8x8xf32>
    %118 = arith.subf %114, %117 : vector<8x8xf32>
    %119 = math.exp %118 : vector<8x8xf32>
    %cst_37 = arith.constant dense<0.000000e+00> : vector<8xf32>
    %120 = vector.multi_reduction <add>, %119, %cst_37 [1] : vector<8x8xf32> to vector<8xf32>
    %121 = vector.shape_cast %120 : vector<8xf32> to vector<8x1xf32>
    %122 = tpu.reciprocal %121 {approx = true} : vector<8x1xf32> -> vector<8x1xf32>
    %123 = vector.broadcast %122 : vector<8x1xf32> to vector<8x8xf32>
    %124 = arith.mulf %119, %123 : vector<8x8xf32>
    %cst_38 = arith.constant dense<0.000000e+00> : vector<8x32xf32>
    %125 = tpu.matmul %124, %111, %cst_38 {dimension_numbers = #tpu.dot_dimension_numbers<[1], [0], [0], [1], [0, 0, 1, 1], [], []>} : vector<8x8xf32>, vector<8x32xf32>, vector<8x32xf32> -> vector<8x32xf32>
    %126 = vector.extract_strided_slice %4 {offsets = [0, 224], sizes = [8, 32], strides = [1, 1]} : vector<8x256xf32> to vector<8x32xf32>
    %127 = vector.extract_strided_slice %5 {offsets = [0, 224], sizes = [8, 32], strides = [1, 1]} : vector<8x256xf32> to vector<8x32xf32>
    %128 = vector.extract_strided_slice %6 {offsets = [0, 224], sizes = [8, 32], strides = [1, 1]} : vector<8x256xf32> to vector<8x32xf32>
    %cst_39 = arith.constant dense<0.000000e+00> : vector<8x8xf32>
    %129 = tpu.matmul %126, %127, %cst_39 {dimension_numbers = #tpu.dot_dimension_numbers<[1], [1], [0], [0], [0, 0, 1, 0], [], []>} : vector<8x32xf32>, vector<8x32xf32>, vector<8x8xf32> -> vector<8x8xf32>
    %cst_40 = arith.constant 0.176776692 : f32
    %130 = vector.broadcast %cst_40 : f32 to vector<8x8xf32>
    %131 = arith.mulf %129, %130 : vector<8x8xf32>
    %cst_41 = arith.constant dense<0xFF800000> : vector<8xf32>
    %132 = vector.multi_reduction <maximumf>, %131, %cst_41 [1] : vector<8x8xf32> to vector<8xf32>
    %133 = vector.shape_cast %132 : vector<8xf32> to vector<8x1xf32>
    %134 = vector.broadcast %133 : vector<8x1xf32> to vector<8x8xf32>
    %135 = arith.subf %131, %134 : vector<8x8xf32>
    %136 = math.exp %135 : vector<8x8xf32>
    %cst_42 = arith.constant dense<0.000000e+00> : vector<8xf32>
    %137 = vector.multi_reduction <add>, %136, %cst_42 [1] : vector<8x8xf32> to vector<8xf32>
    %138 = vector.shape_cast %137 : vector<8xf32> to vector<8x1xf32>
    %139 = tpu.reciprocal %138 {approx = true} : vector<8x1xf32> -> vector<8x1xf32>
    %140 = vector.broadcast %139 : vector<8x1xf32> to vector<8x8xf32>
    %141 = arith.mulf %136, %140 : vector<8x8xf32>
    %cst_43 = arith.constant dense<0.000000e+00> : vector<8x32xf32>
    %142 = tpu.matmul %141, %128, %cst_43 {dimension_numbers = #tpu.dot_dimension_numbers<[1], [0], [0], [1], [0, 0, 1, 1], [], []>} : vector<8x8xf32>, vector<8x32xf32>, vector<8x32xf32> -> vector<8x32xf32>
    %143 = tpu.concatenate %23, %40, %57, %74, %91, %108, %125, %142 in 1 : vector<8x32xf32>, vector<8x32xf32>, vector<8x32xf32>, vector<8x32xf32>, vector<8x32xf32>, vector<8x32xf32>, vector<8x32xf32>, vector<8x32xf32> -> vector<8x256xf32>
    %c0_44 = arith.constant 0 : index
    %c0_45 = arith.constant 0 : index
    %144 = vector.load %arg3[%c0_44, %c0_45] : memref<256x32xf32, #tpu.memory_space<vmem>>, vector<256x32xf32>
    %cst_46 = arith.constant dense<0.000000e+00> : vector<8x32xf32>
    %145 = tpu.matmul %143, %144, %cst_46 {dimension_numbers = #tpu.dot_dimension_numbers<[1], [0], [0], [1], [0, 0, 1, 1], [], []>} : vector<8x256xf32>, vector<256x32xf32>, vector<8x32xf32> -> vector<8x32xf32>
    %c0_47 = arith.constant 0 : index
    %c0_48 = arith.constant 0 : index
    %146 = vector.load %arg4[%c0_47, %c0_48] : memref<1x32xf32, #tpu.memory_space<vmem>>, vector<1x32xf32>
    %147 = vector.broadcast %146 : vector<1x32xf32> to vector<8x32xf32>
    %148 = arith.addf %145, %147 : vector<8x32xf32>
    %c0_49 = arith.constant 0 : index
    %c0_50 = arith.constant 0 : index
    %c0_51 = arith.constant 0 : index
    %149 = vector.load %arg5[%c0_49, %c0_50, %c0_51] : memref<1x8x32xf32, #tpu.memory_space<vmem>>, vector<1x8x32xf32>
    %150 = vector.shape_cast %149 : vector<1x8x32xf32> to vector<8x32xf32>
    %151 = vector.shape_cast %148 : vector<8x32xf32> to vector<1x8x32xf32>
    tpu.vector_store %arg5[%c0_49, %c0_50, %c0_51], %151 {strides = array<i32>} : memref<1x8x32xf32, #tpu.memory_space<vmem>>, vector<1x8x32xf32>,
    return
  }
  func.func @transform_0(%arg0: i32) -> (i32, i32, i32) {
    %c0_i32 = arith.constant 0 : i32
    %c0_i32_0 = arith.constant 0 : i32
    %c0_i32_1 = arith.constant 0 : i32
    return %arg0, %c0_i32, %c0_i32_0 : i32, i32, i32
  }
  func.func @transform_1(%arg0: i32) -> (i32, i32) {
    %c0_i32 = arith.constant 0 : i32
    %c0_i32_0 = arith.constant 0 : i32
    %c0_i32_1 = arith.constant 0 : i32
    return %c0_i32, %c0_i32_0 : i32, i32
  }
  func.func @transform_2(%arg0: i32) -> (i32, i32) {
    %c0_i32 = arith.constant 0 : i32
    %c0_i32_0 = arith.constant 0 : i32
    %c0_i32_1 = arith.constant 0 : i32
    return %c0_i32, %c0_i32_0 : i32, i32
  }
  func.func @transform_3(%arg0: i32) -> (i32, i32) {
    %c0_i32 = arith.constant 0 : i32
    %c0_i32_0 = arith.constant 0 : i32
    %c0_i32_1 = arith.constant 0 : i32
    return %c0_i32, %c0_i32_0 : i32, i32
  }
  func.func @transform_4(%arg0: i32) -> (i32, i32, i32) {
    %c0_i32 = arith.constant 0 : i32
    %c0_i32_0 = arith.constant 0 : i32
    %c0_i32_1 = arith.constant 0 : i32
    return %arg0, %c0_i32, %c0_i32_0 : i32, i32, i32
  }
}

</mosaic_0001>

<llo_original>
// kernel: tpu_custom_call.1
$region0: #{tpu_custom_call.1}
  #allocation0 [shape = 'u32[]', space=smem, size = 0x4, offset = 0x4, fixed_abs, tag = 'smem constant byte address 0x4 - core index']
  #allocation1 [shape = 'u32[72,128]{1,0:T(1,128)}', space=vmem, size = 0x9000, scoped, tag = 'internal scratch']
  %s0 = inlined_call_operand.vmem [shape: f32[2,8,32], index: 0, kind: input, shape index: {}]
  %s1 = inlined_call_operand.vmem [shape: f32[32,768], index: 1, kind: input, shape index: {}]
  %s2 = inlined_call_operand.vmem [shape: f32[256,32], index: 2, kind: input, shape index: {}]
  %s3 = inlined_call_operand.vmem [shape: f32[1,32], index: 3, kind: input, shape index: {}]
  %s4 = inlined_call_operand.hbm [shape: f32[2,8,32], index: 4, kind: output, shape index: {}]
  %s5 = sld [smem:[#allocation0]]
  $region49: #{tpu_custom_call.1} parent=0
    _
  %s7 = ssub.s32 1, %s5
  %s8 = scalar_select 0, %s7, %s5
  $region1: #{tpu_custom_call.1} parent=0
    #allocation2 [shape = 'u8[8192]{0}', space=vmem, size = 0x2000, scoped, tag = 'output window, operand 0']
    #allocation3 [shape = 's32[2]{0}', space=sflag, size = 0x8, scoped, tag = 'scoped memory for tpu_custom_call.1']
    %9 = vsyncpa [#allocation3], 0
    %s10 = scalar_lea.sflag [#allocation3], 1
    %11 = vsyncpa %s10, 0
    loop: start=0, step=1, limit=4
    $region2: #{tpu_custom_call.1} parent=1 // loop_pre_header
      _
    $region3: #{tpu_custom_call.1} parent=1 // loop_header
      %s13 = sphi 0, %s17
      %p14 = scmp.ge.s32.totalorder %s13, 4
      %s23 = sphi 0, %s25
      %s26 = sphi 0, %s23
      %s27 = sphi 0, %s26
      %s43 = sphi 0, %s27
      %s47 = sphi 0, %s47
      %s49 = sphi 0, %s47
      %s50 = sphi 0, %s49
      %s64 = sphi 0, %s50
      %s68 = sphi 0, %s68
      %s70 = sphi 0, %s68
      %s71 = sphi 0, %s70
      %s85 = sphi 0, %s71
      %s89 = sphi 0, %s89
      %s91 = sphi 0, %s89
      %s92 = sphi 0, %s91
      %s106 = sphi 0, %s92
      %s112 = sphi 0, %s114
      %s115 = sphi 0, %s112
      %s116 = sphi 0, %s115
      %s132 = sphi 0, %s116
    $region4: #{tpu_custom_call.1} parent=1 // loop_header_branch
      %16 = sbr.rel (%p14) target = $region8
    $region5: #{tpu_custom_call.1} parent=1 // loop_body
      %s18 = ssub.s32 %s13, 1
      %s19 = ssub.s32 %s13, 2
      %s20 = sadd.s32 %s13, 1
      %s21 = ssub.s32 %s13, %s20
      %p22 = scmp.eq.s32.totalorder %s21, 0
      %s24 = sadd.s32 %s23, 1
      %s25 = scalar_select %p22, %s23, %s24
      %p28 = pneg %p22
      %p29 = scmp.eq.s32.totalorder %s13, 1
      %p30 = por %p28, %p29
      %p31 = scmp.ne.s32.totalorder %s23, %s26
      %p32 = scmp.eq.s32.totalorder %s13, 0
      %p33 = por %p31, %p32
      %p34 = scmp.ne.s32.totalorder %s23, %s26
      %p35 = scmp.eq.s32.totalorder %s18, 1
      %p36 = por %p34, %p35
      %p37 = scmp.ne.s32.totalorder %s26, %s27
      %p38 = scmp.eq.s32.totalorder %s18, 0
      %p39 = por %p37, %p38
      %p40 = scmp.ne.s32.totalorder %s26, %s27
      %p41 = scmp.eq.s32.totalorder %s19, 1
      %p42 = por %p40, %p41
      %p44 = scmp.ne.s32.totalorder %s27, %s43
      %p45 = scmp.eq.s32.totalorder %s19, 0
      %p46 = por %p44, %p45
      %s48 = sadd.s32 %s47, 1
      %p51 = scmp.eq.s32.totalorder %s13, 1
      %p52 = scmp.ne.s32.totalorder %s47, %s49
      %p53 = scmp.eq.s32.totalorder %s13, 0
      %p54 = por %p52, %p53
      %p55 = scmp.ne.s32.totalorder %s47, %s49
      %p56 = scmp.eq.s32.totalorder %s18, 1
      %p57 = por %p55, %p56
      %p58 = scmp.ne.s32.totalorder %s49, %s50
      %p59 = scmp.eq.s32.totalorder %s18, 0
      %p60 = por %p58, %p59
      %p61 = scmp.ne.s32.totalorder %s49, %s50
      %p62 = scmp.eq.s32.totalorder %s19, 1
      %p63 = por %p61, %p62
      %p65 = scmp.ne.s32.totalorder %s50, %s64
      %p66 = scmp.eq.s32.totalorder %s19, 0
      %p67 = por %p65, %p66
      %s69 = sadd.s32 %s68, 1
      %p72 = scmp.eq.s32.totalorder %s13, 1
      %p73 = scmp.ne.s32.totalorder %s68, %s70
      %p74 = scmp.eq.s32.totalorder %s13, 0
      %p75 = por %p73, %p74
      %p76 = scmp.ne.s32.totalorder %s68, %s70
      %p77 = scmp.eq.s32.totalorder %s18, 1
      %p78 = por %p76, %p77
      %p79 = scmp.ne.s32.totalorder %s70, %s71
      %p80 = scmp.eq.s32.totalorder %s18, 0
      %p81 = por %p79, %p80
      %p82 = scmp.ne.s32.totalorder %s70, %s71
      %p83 = scmp.eq.s32.totalorder %s19, 1
      %p84 = por %p82, %p83
      %p86 = scmp.ne.s32.totalorder %s71, %s85
      %p87 = scmp.eq.s32.totalorder %s19, 0
      %p88 = por %p86, %p87
      %s90 = sadd.s32 %s89, 1
      %p93 = scmp.eq.s32.totalorder %s13, 1
      %p94 = scmp.ne.s32.totalorder %s89, %s91
      %p95 = scmp.eq.s32.totalorder %s13, 0
      %p96 = por %p94, %p95
      %p97 = scmp.ne.s32.totalorder %s89, %s91
      %p98 = scmp.eq.s32.totalorder %s18, 1
      %p99 = por %p97, %p98
      %p100 = scmp.ne.s32.totalorder %s91, %s92
      %p101 = scmp.eq.s32.totalorder %s18, 0
      %p102 = por %p100, %p101
      %p103 = scmp.ne.s32.totalorder %s91, %s92
      %p104 = scmp.eq.s32.totalorder %s19, 1
      %p105 = por %p103, %p104
      %p107 = scmp.ne.s32.totalorder %s92, %s106
      %p108 = scmp.eq.s32.totalorder %s19, 0
      %p109 = por %p107, %p108
      %s110 = ssub.s32 %s13, %s20
      %p111 = scmp.eq.s32.totalorder %s110, 0
      %s113 = sadd.s32 %s112, 1
      %s114 = scalar_select %p111, %s112, %s113
      %p117 = pneg %p111
      %p118 = scmp.eq.s32.totalorder %s13, 1
      %p119 = por %p117, %p118
      %p120 = scmp.ne.s32.totalorder %s112, %s115
      %p121 = scmp.eq.s32.totalorder %s13, 0
      %p122 = por %p120, %p121
      %p123 = scmp.ne.s32.totalorder %s112, %s115
      %p124 = scmp.eq.s32.totalorder %s18, 1
      %p125 = por %p123, %p124
      %p126 = scmp.ne.s32.totalorder %s115, %s116
      %p127 = scmp.eq.s32.totalorder %s18, 0
      %p128 = por %p126, %p127
      %p129 = scmp.ne.s32.totalorder %s115, %s116
      %p130 = scmp.eq.s32.totalorder %s19, 1
      %p131 = por %p129, %p130
      %p133 = scmp.ne.s32.totalorder %s116, %s132
      %p134 = scmp.eq.s32.totalorder %s19, 0
      %p135 = por %p133, %p134
      %p136 = scmp.le.s32.totalorder 1, %s13
      %p137 = scmp.lt.s32.totalorder %s13, 3
      %p138 = pnand %p136, %p137
      %p139 = pneg %p138
      // Predicated region
      $region9: #{tpu_custom_call.1} parent=5 // pred_check
        _
      $region10: #{tpu_custom_call.1} parent=5 // pred_check_branch
        %141 = sbr.rel (%p138) target = $region12
      $region11: #{tpu_custom_call.1} parent=5 // pred_region
        %s142 = ssub.s32 %s13, 1
        // Predicated region
        $region13: #{tpu_custom_call.1} parent=11 // pred_check
          %p143 = pneg %p60
        $region14: #{tpu_custom_call.1} parent=11 // pred_check_branch
          %145 = sbr.rel (%p143) target = $region16
        $region15: #{tpu_custom_call.1} parent=11 // pred_region
          _
        $region16: #{tpu_custom_call.1} parent=11 // pred_fallthru
          _
        // Predicated region
        $region17: #{tpu_custom_call.1} parent=11 // pred_check
          %p146 = pneg %p81
        $region18: #{tpu_custom_call.1} parent=11 // pred_check_branch
          %148 = sbr.rel (%p146) target = $region20
        $region19: #{tpu_custom_call.1} parent=11 // pred_region
          _
        $region20: #{tpu_custom_call.1} parent=11 // pred_fallthru
          _
        // Predicated region
        $region21: #{tpu_custom_call.1} parent=11 // pred_check
          %p149 = pneg %p102
        $region22: #{tpu_custom_call.1} parent=11 // pred_check_branch
          %151 = sbr.rel (%p149) target = $region24
        $region23: #{tpu_custom_call.1} parent=11 // pred_region
          _
        $region24: #{tpu_custom_call.1} parent=11 // pred_fallthru
          _
      $region12: #{tpu_custom_call.1} parent=5 // pred_fallthru
        _
      %p152 = scmp.lt.s32.totalorder %s13, 2
      // Predicated region
      $region25: #{tpu_custom_call.1} parent=5 // pred_check
        %p153 = pneg %p152
      $region26: #{tpu_custom_call.1} parent=5 // pred_check_branch
        %155 = sbr.rel (%p153) target = $region28
      $region27: #{tpu_custom_call.1} parent=5 // pred_region
        // Predicated region
        $region29: #{tpu_custom_call.1} parent=27 // pred_check
          %p156 = pneg %p33
        $region30: #{tpu_custom_call.1} parent=27 // pred_check_branch
          %158 = sbr.rel (%p156) target = $region32
        $region31: #{tpu_custom_call.1} parent=27 // pred_region
          %p159 = scmp.lt.s32.totalorder %s13, 1
          %s160 = scalar_select %p159, %s13, 1
          %s161 = smul.addr %s160, 8
          %s162 = scalar_lea.vmem %s0, %s161
        $region32: #{tpu_custom_call.1} parent=27 // pred_fallthru
          _
      $region28: #{tpu_custom_call.1} parent=5 // pred_fallthru
        _
      %p163 = scmp.le.s32.totalorder 1, %s13
      %p164 = scmp.lt.s32.totalorder %s13, 3
      %p165 = pnand %p163, %p164
      %p166 = pneg %p165
      // Predicated region
      $region33: #{tpu_custom_call.1} parent=5 // pred_check
        _
      $region34: #{tpu_custom_call.1} parent=5 // pred_check_branch
        %168 = sbr.rel (%p165) target = $region36
      $region35: #{tpu_custom_call.1} parent=5 // pred_region
        %s169 = ssub.s32 %s13, 1
        %p170 = scmp.lt.s32.totalorder %s18, 1
        %s171 = scalar_select %p170, %s18, 1
        %s172 = smul.addr %s171, 8
        %s173 = scalar_lea.vmem %s0, %s172
        %p174 = pneg %p39
        %p175 = pneg %p36
        %p176 = pneg %p60
        %p177 = pneg %p57
        %p178 = pneg %p81
        %p179 = pneg %p78
        %p180 = pneg %p102
        %p181 = pneg %p99
        %p182 = pneg %p128
        %p183 = pneg %p125
        %s184 = sand.u32 %s115, 1
        %s185 = scalar_lea.sflag [#allocation3], %s184
        %s186 = sand.u32 %s115, 1
        %s187 = smul.addr %s186, 8
        %s188 = scalar_lea.vmem [#allocation2], %s187
        %p189 = scmp.lt.s32.totalorder %s18, 1
        %s190 = scalar_select %p189, %s18, 1
        %s191 = smul.addr %s190, 8
        %s192 = scalar_lea.vmem %s0, %s191
        %v193 = vld [vmem:[%s192] sm:$0xff]
        %v194 = vld [vmem:[%s1] sm:$0xff]
        %v195 = vld [vmem:[%s1 + $0x8] sm:$0xff]
        %v196 = vld [vmem:[%s1 + $0x10] sm:$0xff]
        %v197 = vld [vmem:[%s1 + $0x18] sm:$0xff]
        %v198 = vld [vmem:[%s1 + $0x20] sm:$0xff]
        %v199 = vld [vmem:[%s1 + $0x28] sm:$0xff]
        %v200 = vld [vmem:[%s1 + $0x30] sm:$0xff]
        %v201 = vld [vmem:[%s1 + $0x38] sm:$0xff]
        %v202 = vld [vmem:[%s1 + $0x40] sm:$0xff]
        %v203 = vld [vmem:[%s1 + $0x48] sm:$0xff]
        %v204 = vld [vmem:[%s1 + $0x50] sm:$0xff]
        %v205 = vld [vmem:[%s1 + $0x58] sm:$0xff]
        %v206 = vld [vmem:[%s1 + $0x60] sm:$0xff]
        %v207 = vld [vmem:[%s1 + $0x68] sm:$0xff]
        %v208 = vld [vmem:[%s1 + $0x70] sm:$0xff]
        %v209 = vld [vmem:[%s1 + $0x78] sm:$0xff]
        %v210 = vld [vmem:[%s1 + $0x80] sm:$0xff]
        %v211 = vld [vmem:[%s1 + $0x88] sm:$0xff]
        %v212 = vld [vmem:[%s1 + $0x90] sm:$0xff]
        %v213 = vld [vmem:[%s1 + $0x98] sm:$0xff]
        %v214 = vld [vmem:[%s1 + $0xa0] sm:$0xff]
        %v215 = vld [vmem:[%s1 + $0xa8] sm:$0xff]
        %v216 = vld [vmem:[%s1 + $0xb0] sm:$0xff]
        %v217 = vld [vmem:[%s1 + $0xb8] sm:$0xff]
        %vm218 = vcmask 261120
        %v220 = vsel %vm218, %v193, 0
        %222 = vmatpush.msra.mxu0 0.0
        %223 = vmatpush.msra.mxu0 0.0
        %224 = vmatpush.msra.mxu0 0.0
        %225 = vmatpush.msra.mxu0 0.0
        %226 = vmatpush.msra.mxu0 0.0
        %227 = vmatpush.msra.mxu0 0.0
        %228 = vmatpush.msra.mxu0 0.0
        %229 = vmatpush.msra.mxu0 0.0
        %230 = vmatpush.msra.mxu0 0.0
        %231 = vmatpush.msra.mxu0 0.0
        %232 = vmatpush.msra.mxu0 0.0
        %233 = vmatpush.msra.mxu0 0.0
        %234 = vmatpush.msra.mxu0 %v212
        %235 = vmatpush.msra.mxu0 %v206
        %236 = vmatpush.msra.mxu0 %v200
        %237 = vmatpush.msra.mxu0 %v194
        %238 = vmatmul.f32.gmra.mxu0 %v220
        %v239 = vpop.f32.mrf.mxu0
        %v240 = vadd.f32 0.0, %v239
        %241 = vdwg.mxu0
        %242 = vmatpush.msra.mxu0 0.0
        %243 = vmatpush.msra.mxu0 0.0
        %244 = vmatpush.msra.mxu0 0.0
        %245 = vmatpush.msra.mxu0 0.0
        %246 = vmatpush.msra.mxu0 0.0
        %247 = vmatpush.msra.mxu0 0.0
        %248 = vmatpush.msra.mxu0 0.0
        %249 = vmatpush.msra.mxu0 0.0
        %250 = vmatpush.msra.mxu0 0.0
        %251 = vmatpush.msra.mxu0 0.0
        %252 = vmatpush.msra.mxu0 0.0
        %253 = vmatpush.msra.mxu0 0.0
        %254 = vmatpush.msra.mxu0 %v213
        %255 = vmatpush.msra.mxu0 %v207
        %256 = vmatpush.msra.mxu0 %v201
        %257 = vmatpush.msra.mxu0 %v195
        %258 = vmatmul.f32.gmra.mxu0 %v220
        %v259 = vpop.f32.mrf.mxu0
        %v260 = vadd.f32 0.0, %v259
        %261 = vdwg.mxu0
        %262 = vmatpush.msra.mxu0 0.0
        %263 = vmatpush.msra.mxu0 0.0
        %264 = vmatpush.msra.mxu0 0.0
        %265 = vmatpush.msra.mxu0 0.0
        %266 = vmatpush.msra.mxu0 0.0
        %267 = vmatpush.msra.mxu0 0.0
        %268 = vmatpush.msra.mxu0 0.0
        %269 = vmatpush.msra.mxu0 0.0
        %270 = vmatpush.msra.mxu0 0.0
        %271 = vmatpush.msra.mxu0 0.0
        %272 = vmatpush.msra.mxu0 0.0
        %273 = vmatpush.msra.mxu0 0.0
        %274 = vmatpush.msra.mxu0 %v214
        %275 = vmatpush.msra.mxu0 %v208
        %276 = vmatpush.msra.mxu0 %v202
        %277 = vmatpush.msra.mxu0 %v196
        %278 = vmatmul.f32.gmra.mxu0 %v220
        %v279 = vpop.f32.mrf.mxu0
        %v280 = vadd.f32 0.0, %v279
        %281 = vdwg.mxu0
        %282 = vmatpush.msra.mxu0 0.0
        %283 = vmatpush.msra.mxu0 0.0
        %284 = vmatpush.msra.mxu0 0.0
        %285 = vmatpush.msra.mxu0 0.0
        %286 = vmatpush.msra.mxu0 0.0
        %287 = vmatpush.msra.mxu0 0.0
        %288 = vmatpush.msra.mxu0 0.0
        %289 = vmatpush.msra.mxu0 0.0
        %290 = vmatpush.msra.mxu0 0.0
        %291 = vmatpush.msra.mxu0 0.0
        %292 = vmatpush.msra.mxu0 0.0
        %293 = vmatpush.msra.mxu0 0.0
        %294 = vmatpush.msra.mxu0 %v215
        %295 = vmatpush.msra.mxu0 %v209
        %296 = vmatpush.msra.mxu0 %v203
        %297 = vmatpush.msra.mxu0 %v197
        %298 = vmatmul.f32.gmra.mxu0 %v220
        %v299 = vpop.f32.mrf.mxu0
        %v300 = vadd.f32 0.0, %v299
        %301 = vdwg.mxu0
        %302 = vmatpush.msra.mxu0 0.0
        %303 = vmatpush.msra.mxu0 0.0
        %304 = vmatpush.msra.mxu0 0.0
        %305 = vmatpush.msra.mxu0 0.0
        %306 = vmatpush.msra.mxu0 0.0
        %307 = vmatpush.msra.mxu0 0.0
        %308 = vmatpush.msra.mxu0 0.0
        %309 = vmatpush.msra.mxu0 0.0
        %310 = vmatpush.msra.mxu0 0.0
        %311 = vmatpush.msra.mxu0 0.0
        %312 = vmatpush.msra.mxu0 0.0
        %313 = vmatpush.msra.mxu0 0.0
        %314 = vmatpush.msra.mxu0 %v216
        %315 = vmatpush.msra.mxu0 %v210
        %316 = vmatpush.msra.mxu0 %v204
        %317 = vmatpush.msra.mxu0 %v198
        %318 = vmatmul.f32.gmra.mxu0 %v220
        %v319 = vpop.f32.mrf.mxu0
        %v320 = vadd.f32 0.0, %v319
        %321 = vdwg.mxu0
        %322 = vmatpush.msra.mxu0 0.0
        %323 = vmatpush.msra.mxu0 0.0
        %324 = vmatpush.msra.mxu0 0.0
        %325 = vmatpush.msra.mxu0 0.0
        %326 = vmatpush.msra.mxu0 0.0
        %327 = vmatpush.msra.mxu0 0.0
        %328 = vmatpush.msra.mxu0 0.0
        %329 = vmatpush.msra.mxu0 0.0
        %330 = vmatpush.msra.mxu0 0.0
        %331 = vmatpush.msra.mxu0 0.0
        %332 = vmatpush.msra.mxu0 0.0
        %333 = vmatpush.msra.mxu0 0.0
        %334 = vmatpush.msra.mxu0 %v217
        %335 = vmatpush.msra.mxu0 %v211
        %336 = vmatpush.msra.mxu0 %v205
        %337 = vmatpush.msra.mxu0 %v199
        %338 = vmatmul.f32.gmra.mxu0 %v220
        %v339 = vpop.f32.mrf.mxu0
        %v340 = vadd.f32 0.0, %v339
        %341 = vdwg.mxu0
        %v343 = vsel %vm218, %v240, 0
        %v346 = vsel %vm218, %v280, 0
        %348 = vmatpush.xpose.msra.mxu0 0.0
        %349 = vmatpush.xpose.msra.mxu0 0.0
        %350 = vmatpush.xpose.msra.mxu0 0.0
        %351 = vmatpush.xpose.msra.mxu0 0.0
        %352 = vmatpush.xpose.msra.mxu0 0.0
        %353 = vmatpush.xpose.msra.mxu0 0.0
        %354 = vmatpush.xpose.msra.mxu0 0.0
        %355 = vmatpush.xpose.msra.mxu0 0.0
        %356 = vmatpush.xpose.msra.mxu0 0.0
        %357 = vmatpush.xpose.msra.mxu0 0.0
        %358 = vmatpush.xpose.msra.mxu0 0.0
        %359 = vmatpush.xpose.msra.mxu0 0.0
        %360 = vmatpush.xpose.msra.mxu0 0.0
        %361 = vmatpush.xpose.msra.mxu0 0.0
        %362 = vmatpush.xpose.msra.mxu0 0.0
        %363 = vmatpush.xpose.msra.mxu0 %v346
        %364 = vmatmul.f32.gmra.mxu0 %v343
        %v365 = vpop.f32.mrf.mxu0
        %v366 = vadd.f32 0.0, %v365
        %367 = vdwg.mxu0
        %v368 = vmul.f32 %v366, 0.17677669
        %vm369 = vcmask 64512
        %v370 = vsel %vm369, %v368, -inf
        %371 = vmax.xlane.f32.xlu0 %v370
        %v372 = vpop.xlane.xlu0 %371
        %v373 = vsub.f32 %v368, %v372
        %v374 = vmul.f32 %v373, 1.442695
        %v375 = vpow.pop %v374
        %v376 = vsel %vm369, %v375, 0.0
        %377 = vadd.xlane.f32.xlu0 %v376
        %v378 = vpop.xlane.xlu0 %377
        %v379 = vrcp.pop %v378
        %v380 = vmul.f32 %v375, %v379
        %v382 = vsel %vm369, %v380, 0
        %384 = vmatpush.msra.mxu0 0.0
        %385 = vmatpush.msra.mxu0 0.0
        %386 = vmatpush.msra.mxu0 0.0
        %387 = vmatpush.msra.mxu0 0.0
        %388 = vmatpush.msra.mxu0 0.0
        %389 = vmatpush.msra.mxu0 0.0
        %390 = vmatpush.msra.mxu0 0.0
        %391 = vmatpush.msra.mxu0 0.0
        %392 = vmatpush.msra.mxu0 0.0
        %393 = vmatpush.msra.mxu0 0.0
        %394 = vmatpush.msra.mxu0 0.0
        %395 = vmatpush.msra.mxu0 0.0
        %396 = vmatpush.msra.mxu0 0.0
        %397 = vmatpush.msra.mxu0 0.0
        %398 = vmatpush.msra.mxu0 0.0
        %399 = vmatpush.msra.mxu0 %v320
        %400 = vmatmul.f32.gmra.mxu0 %v382
        %v401 = vpop.f32.mrf.mxu0
        %v402 = vadd.f32 0.0, %v401
        %403 = vdwg.mxu0
        %404 = vrot.lane.b32.xlu0 %v240, 96
        %v405 = vpop.permute.xlu0 %404
        %406 = vrot.lane.b32.xlu0 %v280, 96
        %v407 = vpop.permute.xlu0 %406
        %v408 = vsel %vm218, %v405, 0
        %v410 = vsel %vm218, %v407, 0
        %412 = vmatpush.xpose.msra.mxu0 0.0
        %413 = vmatpush.xpose.msra.mxu0 0.0
        %414 = vmatpush.xpose.msra.mxu0 0.0
        %415 = vmatpush.xpose.msra.mxu0 0.0
        %416 = vmatpush.xpose.msra.mxu0 0.0
        %417 = vmatpush.xpose.msra.mxu0 0.0
        %418 = vmatpush.xpose.msra.mxu0 0.0
        %419 = vmatpush.xpose.msra.mxu0 0.0
        %420 = vmatpush.xpose.msra.mxu0 0.0
        %421 = vmatpush.xpose.msra.mxu0 0.0
        %422 = vmatpush.xpose.msra.mxu0 0.0
        %423 = vmatpush.xpose.msra.mxu0 0.0
        %424 = vmatpush.xpose.msra.mxu0 0.0
        %425 = vmatpush.xpose.msra.mxu0 0.0
        %426 = vmatpush.xpose.msra.mxu0 0.0
        %427 = vmatpush.xpose.msra.mxu0 %v410
        %428 = vmatmul.f32.gmra.mxu0 %v408
        %v429 = vpop.f32.mrf.mxu0
        %v430 = vadd.f32 0.0, %v429
        %431 = vdwg.mxu0
        %v432 = vmul.f32 %v430, 0.17677669
        %v433 = vsel %vm369, %v432, -inf
        %434 = vmax.xlane.f32.xlu0 %v433
        %v435 = vpop.xlane.xlu0 %434
        %v436 = vsub.f32 %v432, %v435
        %v437 = vmul.f32 %v436, 1.442695
        %v438 = vpow.pop %v437
        %v439 = vsel %vm369, %v438, 0.0
        %440 = vadd.xlane.f32.xlu0 %v439
        %v441 = vpop.xlane.xlu0 %440
        %v442 = vrcp.pop %v441
        %v443 = vmul.f32 %v438, %v442
        %445 = vrot.lane.b32.xlu0 %v320, 96
        %v446 = vpop.permute.xlu0 %445
        %v449 = vsel %vm369, %v443, 0
        %451 = vmatpush.msra.mxu0 0.0
        %452 = vmatpush.msra.mxu0 0.0
        %453 = vmatpush.msra.mxu0 0.0
        %454 = vmatpush.msra.mxu0 0.0
        %455 = vmatpush.msra.mxu0 0.0
        %456 = vmatpush.msra.mxu0 0.0
        %457 = vmatpush.msra.mxu0 0.0
        %458 = vmatpush.msra.mxu0 0.0
        %459 = vmatpush.msra.mxu0 0.0
        %460 = vmatpush.msra.mxu0 0.0
        %461 = vmatpush.msra.mxu0 0.0
        %462 = vmatpush.msra.mxu0 0.0
        %463 = vmatpush.msra.mxu0 0.0
        %464 = vmatpush.msra.mxu0 0.0
        %465 = vmatpush.msra.mxu0 0.0
        %466 = vmatpush.msra.mxu0 %v446
        %467 = vmatmul.f32.gmra.mxu0 %v449
        %v468 = vpop.f32.mrf.mxu0
        %v469 = vadd.f32 0.0, %v468
        %470 = vdwg.mxu0
        %471 = vrot.lane.b32.xlu0 %v240, 64
        %v472 = vpop.permute.xlu0 %471
        %473 = vrot.lane.b32.xlu0 %v280, 64
        %v474 = vpop.permute.xlu0 %473
        %v475 = vsel %vm218, %v472, 0
        %v477 = vsel %vm218, %v474, 0
        %479 = vmatpush.xpose.msra.mxu0 0.0
        %480 = vmatpush.xpose.msra.mxu0 0.0
        %481 = vmatpush.xpose.msra.mxu0 0.0
        %482 = vmatpush.xpose.msra.mxu0 0.0
        %483 = vmatpush.xpose.msra.mxu0 0.0
        %484 = vmatpush.xpose.msra.mxu0 0.0
        %485 = vmatpush.xpose.msra.mxu0 0.0
        %486 = vmatpush.xpose.msra.mxu0 0.0
        %487 = vmatpush.xpose.msra.mxu0 0.0
        %488 = vmatpush.xpose.msra.mxu0 0.0
        %489 = vmatpush.xpose.msra.mxu0 0.0
        %490 = vmatpush.xpose.msra.mxu0 0.0
        %491 = vmatpush.xpose.msra.mxu0 0.0
        %492 = vmatpush.xpose.msra.mxu0 0.0
        %493 = vmatpush.xpose.msra.mxu0 0.0
        %494 = vmatpush.xpose.msra.mxu0 %v477
        %495 = vmatmul.f32.gmra.mxu0 %v475
        %v496 = vpop.f32.mrf.mxu0
        %v497 = vadd.f32 0.0, %v496
        %498 = vdwg.mxu0
        %v499 = vmul.f32 %v497, 0.17677669
        %v500 = vsel %vm369, %v499, -inf
        %501 = vmax.xlane.f32.xlu0 %v500
        %v502 = vpop.xlane.xlu0 %501
        %v503 = vsub.f32 %v499, %v502
        %v504 = vmul.f32 %v503, 1.442695
        %v505 = vpow.pop %v504
        %v506 = vsel %vm369, %v505, 0.0
        %507 = vadd.xlane.f32.xlu0 %v506
        %v508 = vpop.xlane.xlu0 %507
        %v509 = vrcp.pop %v508
        %v510 = vmul.f32 %v505, %v509
        %511 = vrot.lane.b32.xlu0 %v320, 64
        %v512 = vpop.permute.xlu0 %511
        %v515 = vsel %vm369, %v510, 0
        %517 = vmatpush.msra.mxu0 0.0
        %518 = vmatpush.msra.mxu0 0.0
        %519 = vmatpush.msra.mxu0 0.0
        %520 = vmatpush.msra.mxu0 0.0
        %521 = vmatpush.msra.mxu0 0.0
        %522 = vmatpush.msra.mxu0 0.0
        %523 = vmatpush.msra.mxu0 0.0
        %524 = vmatpush.msra.mxu0 0.0
        %525 = vmatpush.msra.mxu0 0.0
        %526 = vmatpush.msra.mxu0 0.0
        %527 = vmatpush.msra.mxu0 0.0
        %528 = vmatpush.msra.mxu0 0.0
        %529 = vmatpush.msra.mxu0 0.0
        %530 = vmatpush.msra.mxu0 0.0
        %531 = vmatpush.msra.mxu0 0.0
        %532 = vmatpush.msra.mxu0 %v512
        %533 = vmatmul.f32.gmra.mxu0 %v515
        %v534 = vpop.f32.mrf.mxu0
        %v535 = vadd.f32 0.0, %v534
        %536 = vdwg.mxu0
        %537 = vrot.lane.b32.xlu0 %v240, 32
        %v538 = vpop.permute.xlu0 %537
        %539 = vrot.lane.b32.xlu0 %v280, 32
        %v540 = vpop.permute.xlu0 %539
        %v541 = vsel %vm218, %v538, 0
        %v543 = vsel %vm218, %v540, 0
        %545 = vmatpush.xpose.msra.mxu0 0.0
        %546 = vmatpush.xpose.msra.mxu0 0.0
        %547 = vmatpush.xpose.msra.mxu0 0.0
        %548 = vmatpush.xpose.msra.mxu0 0.0
        %549 = vmatpush.xpose.msra.mxu0 0.0
        %550 = vmatpush.xpose.msra.mxu0 0.0
        %551 = vmatpush.xpose.msra.mxu0 0.0
        %552 = vmatpush.xpose.msra.mxu0 0.0
        %553 = vmatpush.xpose.msra.mxu0 0.0
        %554 = vmatpush.xpose.msra.mxu0 0.0
        %555 = vmatpush.xpose.msra.mxu0 0.0
        %556 = vmatpush.xpose.msra.mxu0 0.0
        %557 = vmatpush.xpose.msra.mxu0 0.0
        %558 = vmatpush.xpose.msra.mxu0 0.0
        %559 = vmatpush.xpose.msra.mxu0 0.0
        %560 = vmatpush.xpose.msra.mxu0 %v543
        %561 = vmatmul.f32.gmra.mxu0 %v541
        %v562 = vpop.f32.mrf.mxu0
        %v563 = vadd.f32 0.0, %v562
        %564 = vdwg.mxu0
        %v565 = vmul.f32 %v563, 0.17677669
        %v566 = vsel %vm369, %v565, -inf
        %567 = vmax.xlane.f32.xlu0 %v566
        %v568 = vpop.xlane.xlu0 %567
        %v569 = vsub.f32 %v565, %v568
        %v570 = vmul.f32 %v569, 1.442695
        %v571 = vpow.pop %v570
        %v572 = vsel %vm369, %v571, 0.0
        %573 = vadd.xlane.f32.xlu0 %v572
        %v574 = vpop.xlane.xlu0 %573
        %v575 = vrcp.pop %v574
        %v576 = vmul.f32 %v571, %v575
        %577 = vrot.lane.b32.xlu0 %v320, 32
        %v578 = vpop.permute.xlu0 %577
        %v581 = vsel %vm369, %v576, 0
        %583 = vmatpush.msra.mxu0 0.0
        %584 = vmatpush.msra.mxu0 0.0
        %585 = vmatpush.msra.mxu0 0.0
        %586 = vmatpush.msra.mxu0 0.0
        %587 = vmatpush.msra.mxu0 0.0
        %588 = vmatpush.msra.mxu0 0.0
        %589 = vmatpush.msra.mxu0 0.0
        %590 = vmatpush.msra.mxu0 0.0
        %591 = vmatpush.msra.mxu0 0.0
        %592 = vmatpush.msra.mxu0 0.0
        %593 = vmatpush.msra.mxu0 0.0
        %594 = vmatpush.msra.mxu0 0.0
        %595 = vmatpush.msra.mxu0 0.0
        %596 = vmatpush.msra.mxu0 0.0
        %597 = vmatpush.msra.mxu0 0.0
        %598 = vmatpush.msra.mxu0 %v578
        %599 = vmatmul.f32.gmra.mxu0 %v581
        %v600 = vpop.f32.mrf.mxu0
        %v601 = vadd.f32 0.0, %v600
        %602 = vdwg.mxu0
        %v604 = vsel %vm218, %v260, 0
        %v607 = vsel %vm218, %v300, 0
        %609 = vmatpush.xpose.msra.mxu0 0.0
        %610 = vmatpush.xpose.msra.mxu0 0.0
        %611 = vmatpush.xpose.msra.mxu0 0.0
        %612 = vmatpush.xpose.msra.mxu0 0.0
        %613 = vmatpush.xpose.msra.mxu0 0.0
        %614 = vmatpush.xpose.msra.mxu0 0.0
        %615 = vmatpush.xpose.msra.mxu0 0.0
        %616 = vmatpush.xpose.msra.mxu0 0.0
        %617 = vmatpush.xpose.msra.mxu0 0.0
        %618 = vmatpush.xpose.msra.mxu0 0.0
        %619 = vmatpush.xpose.msra.mxu0 0.0
        %620 = vmatpush.xpose.msra.mxu0 0.0
        %621 = vmatpush.xpose.msra.mxu0 0.0
        %622 = vmatpush.xpose.msra.mxu0 0.0
        %623 = vmatpush.xpose.msra.mxu0 0.0
        %624 = vmatpush.xpose.msra.mxu0 %v607
        %625 = vmatmul.f32.gmra.mxu0 %v604
        %v626 = vpop.f32.mrf.mxu0
        %v627 = vadd.f32 0.0, %v626
        %628 = vdwg.mxu0
        %v629 = vmul.f32 %v627, 0.17677669
        %v630 = vsel %vm369, %v629, -inf
        %631 = vmax.xlane.f32.xlu0 %v630
        %v632 = vpop.xlane.xlu0 %631
        %v633 = vsub.f32 %v629, %v632
        %v634 = vmul.f32 %v633, 1.442695
        %v635 = vpow.pop %v634
        %v636 = vsel %vm369, %v635, 0.0
        %637 = vadd.xlane.f32.xlu0 %v636
        %v638 = vpop.xlane.xlu0 %637
        %v639 = vrcp.pop %v638
        %v640 = vmul.f32 %v635, %v639
        %v642 = vsel %vm369, %v640, 0
        %644 = vmatpush.msra.mxu0 0.0
        %645 = vmatpush.msra.mxu0 0.0
        %646 = vmatpush.msra.mxu0 0.0
        %647 = vmatpush.msra.mxu0 0.0
        %648 = vmatpush.msra.mxu0 0.0
        %649 = vmatpush.msra.mxu0 0.0
        %650 = vmatpush.msra.mxu0 0.0
        %651 = vmatpush.msra.mxu0 0.0
        %652 = vmatpush.msra.mxu0 0.0
        %653 = vmatpush.msra.mxu0 0.0
        %654 = vmatpush.msra.mxu0 0.0
        %655 = vmatpush.msra.mxu0 0.0
        %656 = vmatpush.msra.mxu0 0.0
        %657 = vmatpush.msra.mxu0 0.0
        %658 = vmatpush.msra.mxu0 0.0
        %659 = vmatpush.msra.mxu0 %v340
        %660 = vmatmul.f32.gmra.mxu0 %v642
        %v661 = vpop.f32.mrf.mxu0
        %v662 = vadd.f32 0.0, %v661
        %663 = vdwg.mxu0
        %664 = vrot.lane.b32.xlu0 %v260, 96
        %v665 = vpop.permute.xlu0 %664
        %666 = vrot.lane.b32.xlu0 %v300, 96
        %v667 = vpop.permute.xlu0 %666
        %v668 = vsel %vm218, %v665, 0
        %v670 = vsel %vm218, %v667, 0
        %672 = vmatpush.xpose.msra.mxu0 0.0
        %673 = vmatpush.xpose.msra.mxu0 0.0
        %674 = vmatpush.xpose.msra.mxu0 0.0
        %675 = vmatpush.xpose.msra.mxu0 0.0
        %676 = vmatpush.xpose.msra.mxu0 0.0
        %677 = vmatpush.xpose.msra.mxu0 0.0
        %678 = vmatpush.xpose.msra.mxu0 0.0
        %679 = vmatpush.xpose.msra.mxu0 0.0
        %680 = vmatpush.xpose.msra.mxu0 0.0
        %681 = vmatpush.xpose.msra.mxu0 0.0
        %682 = vmatpush.xpose.msra.mxu0 0.0
        %683 = vmatpush.xpose.msra.mxu0 0.0
        %684 = vmatpush.xpose.msra.mxu0 0.0
        %685 = vmatpush.xpose.msra.mxu0 0.0
        %686 = vmatpush.xpose.msra.mxu0 0.0
        %687 = vmatpush.xpose.msra.mxu0 %v670
        %688 = vmatmul.f32.gmra.mxu0 %v668
        %v689 = vpop.f32.mrf.mxu0
        %v690 = vadd.f32 0.0, %v689
        %691 = vdwg.mxu0
        %v692 = vmul.f32 %v690, 0.17677669
        %v693 = vsel %vm369, %v692, -inf
        %694 = vmax.xlane.f32.xlu0 %v693
        %v695 = vpop.xlane.xlu0 %694
        %v696 = vsub.f32 %v692, %v695
        %v697 = vmul.f32 %v696, 1.442695
        %v698 = vpow.pop %v697
        %v699 = vsel %vm369, %v698, 0.0
        %700 = vadd.xlane.f32.xlu0 %v699
        %v701 = vpop.xlane.xlu0 %700
        %v702 = vrcp.pop %v701
        %v703 = vmul.f32 %v698, %v702
        %705 = vrot.lane.b32.xlu0 %v340, 96
        %v706 = vpop.permute.xlu0 %705
        %v709 = vsel %vm369, %v703, 0
        %711 = vmatpush.msra.mxu0 0.0
        %712 = vmatpush.msra.mxu0 0.0
        %713 = vmatpush.msra.mxu0 0.0
        %714 = vmatpush.msra.mxu0 0.0
        %715 = vmatpush.msra.mxu0 0.0
        %716 = vmatpush.msra.mxu0 0.0
        %717 = vmatpush.msra.mxu0 0.0
        %718 = vmatpush.msra.mxu0 0.0
        %719 = vmatpush.msra.mxu0 0.0
        %720 = vmatpush.msra.mxu0 0.0
        %721 = vmatpush.msra.mxu0 0.0
        %722 = vmatpush.msra.mxu0 0.0
        %723 = vmatpush.msra.mxu0 0.0
        %724 = vmatpush.msra.mxu0 0.0
        %725 = vmatpush.msra.mxu0 0.0
        %726 = vmatpush.msra.mxu0 %v706
        %727 = vmatmul.f32.gmra.mxu0 %v709
        %v728 = vpop.f32.mrf.mxu0
        %v729 = vadd.f32 0.0, %v728
        %730 = vdwg.mxu0
        %731 = vrot.lane.b32.xlu0 %v260, 64
        %v732 = vpop.permute.xlu0 %731
        %733 = vrot.lane.b32.xlu0 %v300, 64
        %v734 = vpop.permute.xlu0 %733
        %v735 = vsel %vm218, %v732, 0
        %v737 = vsel %vm218, %v734, 0
        %739 = vmatpush.xpose.msra.mxu0 0.0
        %740 = vmatpush.xpose.msra.mxu0 0.0
        %741 = vmatpush.xpose.msra.mxu0 0.0
        %742 = vmatpush.xpose.msra.mxu0 0.0
        %743 = vmatpush.xpose.msra.mxu0 0.0
        %744 = vmatpush.xpose.msra.mxu0 0.0
        %745 = vmatpush.xpose.msra.mxu0 0.0
        %746 = vmatpush.xpose.msra.mxu0 0.0
        %747 = vmatpush.xpose.msra.mxu0 0.0
        %748 = vmatpush.xpose.msra.mxu0 0.0
        %749 = vmatpush.xpose.msra.mxu0 0.0
        %750 = vmatpush.xpose.msra.mxu0 0.0
        %751 = vmatpush.xpose.msra.mxu0 0.0
        %752 = vmatpush.xpose.msra.mxu0 0.0
        %753 = vmatpush.xpose.msra.mxu0 0.0
        %754 = vmatpush.xpose.msra.mxu0 %v737
        %755 = vmatmul.f32.gmra.mxu0 %v735
        %v756 = vpop.f32.mrf.mxu0
        %v757 = vadd.f32 0.0, %v756
        %758 = vdwg.mxu0
        %v759 = vmul.f32 %v757, 0.17677669
        %v760 = vsel %vm369, %v759, -inf
        %761 = vmax.xlane.f32.xlu0 %v760
        %v762 = vpop.xlane.xlu0 %761
        %v763 = vsub.f32 %v759, %v762
        %v764 = vmul.f32 %v763, 1.442695
        %v765 = vpow.pop %v764
        %v766 = vsel %vm369, %v765, 0.0
        %767 = vadd.xlane.f32.xlu0 %v766
        %v768 = vpop.xlane.xlu0 %767
        %v769 = vrcp.pop %v768
        %v770 = vmul.f32 %v765, %v769
        %771 = vrot.lane.b32.xlu0 %v340, 64
        %v772 = vpop.permute.xlu0 %771
        %v775 = vsel %vm369, %v770, 0
        %777 = vmatpush.msra.mxu0 0.0
        %778 = vmatpush.msra.mxu0 0.0
        %779 = vmatpush.msra.mxu0 0.0
        %780 = vmatpush.msra.mxu0 0.0
        %781 = vmatpush.msra.mxu0 0.0
        %782 = vmatpush.msra.mxu0 0.0
        %783 = vmatpush.msra.mxu0 0.0
        %784 = vmatpush.msra.mxu0 0.0
        %785 = vmatpush.msra.mxu0 0.0
        %786 = vmatpush.msra.mxu0 0.0
        %787 = vmatpush.msra.mxu0 0.0
        %788 = vmatpush.msra.mxu0 0.0
        %789 = vmatpush.msra.mxu0 0.0
        %790 = vmatpush.msra.mxu0 0.0
        %791 = vmatpush.msra.mxu0 0.0
        %792 = vmatpush.msra.mxu0 %v772
        %793 = vmatmul.f32.gmra.mxu0 %v775
        %v794 = vpop.f32.mrf.mxu0
        %v795 = vadd.f32 0.0, %v794
        %796 = vdwg.mxu0
        %797 = vrot.lane.b32.xlu0 %v260, 32
        %v798 = vpop.permute.xlu0 %797
        %799 = vrot.lane.b32.xlu0 %v300, 32
        %v800 = vpop.permute.xlu0 %799
        %v801 = vsel %vm218, %v798, 0
        %v803 = vsel %vm218, %v800, 0
        %805 = vmatpush.xpose.msra.mxu0 0.0
        %806 = vmatpush.xpose.msra.mxu0 0.0
        %807 = vmatpush.xpose.msra.mxu0 0.0
        %808 = vmatpush.xpose.msra.mxu0 0.0
        %809 = vmatpush.xpose.msra.mxu0 0.0
        %810 = vmatpush.xpose.msra.mxu0 0.0
        %811 = vmatpush.xpose.msra.mxu0 0.0
        %812 = vmatpush.xpose.msra.mxu0 0.0
        %813 = vmatpush.xpose.msra.mxu0 0.0
        %814 = vmatpush.xpose.msra.mxu0 0.0
        %815 = vmatpush.xpose.msra.mxu0 0.0
        %816 = vmatpush.xpose.msra.mxu0 0.0
        %817 = vmatpush.xpose.msra.mxu0 0.0
        %818 = vmatpush.xpose.msra.mxu0 0.0
        %819 = vmatpush.xpose.msra.mxu0 0.0
        %820 = vmatpush.xpose.msra.mxu0 %v803
        %821 = vmatmul.f32.gmra.mxu0 %v801
        %v822 = vpop.f32.mrf.mxu0
        %v823 = vadd.f32 0.0, %v822
        %824 = vdwg.mxu0
        %v825 = vmul.f32 %v823, 0.17677669
        %v826 = vsel %vm369, %v825, -inf
        %827 = vmax.xlane.f32.xlu0 %v826
        %v828 = vpop.xlane.xlu0 %827
        %v829 = vsub.f32 %v825, %v828
        %v830 = vmul.f32 %v829, 1.442695
        %v831 = vpow.pop %v830
        %v832 = vsel %vm369, %v831, 0.0
        %833 = vadd.xlane.f32.xlu0 %v832
        %v834 = vpop.xlane.xlu0 %833
        %v835 = vrcp.pop %v834
        %v836 = vmul.f32 %v831, %v835
        %837 = vrot.lane.b32.xlu0 %v340, 32
        %v838 = vpop.permute.xlu0 %837
        %v841 = vsel %vm369, %v836, 0
        %843 = vmatpush.msra.mxu0 0.0
        %844 = vmatpush.msra.mxu0 0.0
        %845 = vmatpush.msra.mxu0 0.0
        %846 = vmatpush.msra.mxu0 0.0
        %847 = vmatpush.msra.mxu0 0.0
        %848 = vmatpush.msra.mxu0 0.0
        %849 = vmatpush.msra.mxu0 0.0
        %850 = vmatpush.msra.mxu0 0.0
        %851 = vmatpush.msra.mxu0 0.0
        %852 = vmatpush.msra.mxu0 0.0
        %853 = vmatpush.msra.mxu0 0.0
        %854 = vmatpush.msra.mxu0 0.0
        %855 = vmatpush.msra.mxu0 0.0
        %856 = vmatpush.msra.mxu0 0.0
        %857 = vmatpush.msra.mxu0 0.0
        %858 = vmatpush.msra.mxu0 %v838
        %859 = vmatmul.f32.gmra.mxu0 %v841
        %v860 = vpop.f32.mrf.mxu0
        %v861 = vadd.f32 0.0, %v860
        %862 = vdwg.mxu0
        %864 = vrot.lane.b32.xlu0 %v469, 32
        %v865 = vpop.permute.xlu0 %864
        %868 = vrot.lane.b32.xlu0 %v535, 64
        %v869 = vpop.permute.xlu0 %868
        %872 = vrot.lane.b32.xlu0 %v601, 96
        %v873 = vpop.permute.xlu0 %872
        %876 = vrot.lane.b32.xlu0 %v729, 32
        %v877 = vpop.permute.xlu0 %876
        %880 = vrot.lane.b32.xlu0 %v795, 64
        %v881 = vpop.permute.xlu0 %880
        %884 = vrot.lane.b32.xlu0 %v861, 96
        %v885 = vpop.permute.xlu0 %884
        %v887 = vsel %vm218, %v402, %v865
        %vm888 = vcmask 523264
        %v889 = vsel %vm888, %v887, %v869
        %vm890 = vcmask 785408
        %v891 = vsel %vm890, %v889, %v873
        %v892 = vsel %vm218, %v662, %v877
        %v893 = vsel %vm888, %v892, %v881
        %v894 = vsel %vm890, %v893, %v885
        %v895 = vld [vmem:[%s2] sm:$0xff]
        %v896 = vld [vmem:[%s2 + $0x8] sm:$0xff]
        %v897 = vld [vmem:[%s2 + $0x10] sm:$0xff]
        %v898 = vld [vmem:[%s2 + $0x18] sm:$0xff]
        %v899 = vld [vmem:[%s2 + $0x20] sm:$0xff]
        %v900 = vld [vmem:[%s2 + $0x28] sm:$0xff]
        %v901 = vld [vmem:[%s2 + $0x30] sm:$0xff]
        %v902 = vld [vmem:[%s2 + $0x38] sm:$0xff]
        %v903 = vld [vmem:[%s2 + $0x40] sm:$0xff]
        %v904 = vld [vmem:[%s2 + $0x48] sm:$0xff]
        %v905 = vld [vmem:[%s2 + $0x50] sm:$0xff]
        %v906 = vld [vmem:[%s2 + $0x58] sm:$0xff]
        %v907 = vld [vmem:[%s2 + $0x60] sm:$0xff]
        %v908 = vld [vmem:[%s2 + $0x68] sm:$0xff]
        %v909 = vld [vmem:[%s2 + $0x70] sm:$0xff]
        %v910 = vld [vmem:[%s2 + $0x78] sm:$0xff]
        %v911 = vld [vmem:[%s2 + $0x80] sm:$0xff]
        %v912 = vld [vmem:[%s2 + $0x88] sm:$0xff]
        %v913 = vld [vmem:[%s2 + $0x90] sm:$0xff]
        %v914 = vld [vmem:[%s2 + $0x98] sm:$0xff]
        %v915 = vld [vmem:[%s2 + $0xa0] sm:$0xff]
        %v916 = vld [vmem:[%s2 + $0xa8] sm:$0xff]
        %v917 = vld [vmem:[%s2 + $0xb0] sm:$0xff]
        %v918 = vld [vmem:[%s2 + $0xb8] sm:$0xff]
        %v919 = vld [vmem:[%s2 + $0xc0] sm:$0xff]
        %v920 = vld [vmem:[%s2 + $0xc8] sm:$0xff]
        %v921 = vld [vmem:[%s2 + $0xd0] sm:$0xff]
        %v922 = vld [vmem:[%s2 + $0xd8] sm:$0xff]
        %v923 = vld [vmem:[%s2 + $0xe0] sm:$0xff]
        %v924 = vld [vmem:[%s2 + $0xe8] sm:$0xff]
        %v925 = vld [vmem:[%s2 + $0xf0] sm:$0xff]
        %v926 = vld [vmem:[%s2 + $0xf8] sm:$0xff]
        %v927 = vld [vmem:[%s3] sm:$0x1]
        %v929 = vperm.slane %v927, 0
        %931 = vmatpush.msra.mxu0 %v910
        %932 = vmatpush.msra.mxu0 %v909
        %933 = vmatpush.msra.mxu0 %v908
        %934 = vmatpush.msra.mxu0 %v907
        %935 = vmatpush.msra.mxu0 %v906
        %936 = vmatpush.msra.mxu0 %v905
        %937 = vmatpush.msra.mxu0 %v904
        %938 = vmatpush.msra.mxu0 %v903
        %939 = vmatpush.msra.mxu0 %v902
        %940 = vmatpush.msra.mxu0 %v901
        %941 = vmatpush.msra.mxu0 %v900
        %942 = vmatpush.msra.mxu0 %v899
        %943 = vmatpush.msra.mxu0 %v898
        %944 = vmatpush.msra.mxu0 %v897
        %945 = vmatpush.msra.mxu0 %v896
        %946 = vmatpush.msra.mxu0 %v895
        %947 = vmatmul.f32.gmra.mxu0 %v891
        %v948 = vpop.f32.mrf.mxu0
        %v949 = vadd.f32 %v929, %v948
        %950 = vdwg.mxu0
        %951 = vmatpush.msra.mxu0 %v926
        %952 = vmatpush.msra.mxu0 %v925
        %953 = vmatpush.msra.mxu0 %v924
        %954 = vmatpush.msra.mxu0 %v923
        %955 = vmatpush.msra.mxu0 %v922
        %956 = vmatpush.msra.mxu0 %v921
        %957 = vmatpush.msra.mxu0 %v920
        %958 = vmatpush.msra.mxu0 %v919
        %959 = vmatpush.msra.mxu0 %v918
        %960 = vmatpush.msra.mxu0 %v917
        %961 = vmatpush.msra.mxu0 %v916
        %962 = vmatpush.msra.mxu0 %v915
        %963 = vmatpush.msra.mxu0 %v914
        %964 = vmatpush.msra.mxu0 %v913
        %965 = vmatpush.msra.mxu0 %v912
        %966 = vmatpush.msra.mxu0 %v911
        %967 = vmatmul.f32.gmra.mxu0 %v894
        %v968 = vpop.f32.mrf.mxu0
        %v969 = vadd.f32 %v949, %v968
        %970 = vdwg.mxu0
        %971 = vst.msk [vmem:[%s188] sm:$0xff] %vm218, %v969
        %s972 = sand.u32 %s115, 1
        %s973 = scalar_lea.sflag [#allocation3], %s972
        %s974 = sand.u32 %s115, 1
        %s975 = smul.addr %s974, 8
        %s976 = scalar_lea.vmem [#allocation2], %s975
        // Predicated region
        $region37: #{tpu_custom_call.1} parent=35 // pred_check
          %p977 = pneg %p125
        $region38: #{tpu_custom_call.1} parent=35 // pred_check_branch
          %979 = sbr.rel (%p977) target = $region40
        $region39: #{tpu_custom_call.1} parent=35 // pred_region
          %981 = vsyncadd %s973, 0
          %s982 = smul.addr %s18, 8
          %s983 = scalar_lea.hbm %s4, %s982
          %s985 = sshll.u32 %s976, 4
          %s986 = int_to_ptr.vmem [resolvable:$true] %s985
          %s987 = sshll.u32 %s983, 4
          %s988 = int_to_ptr.hbm [resolvable:$true] %s987
          %990 = dma.vmem_to_hbm [thread:$0]  %s986, 128, %s988, %s973
        $region40: #{tpu_custom_call.1} parent=35 // pred_fallthru
          _
      $region36: #{tpu_custom_call.1} parent=5 // pred_fallthru
        _
      %p991 = scmp.le.s32.totalorder 2, %s13
      // Predicated region
      $region41: #{tpu_custom_call.1} parent=5 // pred_check
        %p992 = pneg %p991
      $region42: #{tpu_custom_call.1} parent=5 // pred_check_branch
        %994 = sbr.rel (%p992) target = $region44
      $region43: #{tpu_custom_call.1} parent=5 // pred_region
        %s995 = ssub.s32 %s13, 2
        // Predicated region
        $region45: #{tpu_custom_call.1} parent=43 // pred_check
          %p996 = pneg %p131
        $region46: #{tpu_custom_call.1} parent=43 // pred_check_branch
          %998 = sbr.rel (%p996) target = $region48
        $region47: #{tpu_custom_call.1} parent=43 // pred_region
          %s999 = sand.u32 %s116, 1
          %s1000 = scalar_lea.sflag [#allocation3], %s999
          %s1001 = sand.u32 %s116, 1
          %s1002 = smul.addr %s1001, 8
          %s1003 = scalar_lea.vmem [#allocation2], %s1002
          %1005 = dma.done %s1000, 128
        $region48: #{tpu_custom_call.1} parent=43 // pred_fallthru
          _
      $region44: #{tpu_custom_call.1} parent=5 // pred_fallthru
        _
    $region6: #{tpu_custom_call.1} parent=1 // loop_footer
      %s17 = sadd.s32 1, %s13
    $region7: #{tpu_custom_call.1} parent=1 // loop_footer_branch
      %12 = sbr.rel target = $region3
    $region8: #{tpu_custom_call.1} parent=1 // loop_exit
      _
    %1006 = vsyncpa [#allocation3], 1
    %s1007 = scalar_lea.sflag [#allocation3], 1
    %1008 = vsyncpa %s1007, 1

</llo_original>
